<compile_context>
chip_gen: v7x
topology: tpu7x:2x2x1
jax: 0.10.0
libtpu: 0.0.40
codegen_flags: <defaults>
</compile_context>

<pallas_src>
import jax
import jax.numpy as jnp
from jax.experimental import pallas as pl
from jax.experimental.pallas import tpu as pltpu


def _joints_sum_loss_kernel(l2d_ref, xz_ref, yz_ref, out_ref):
    # Block shapes (rows = flattened N*C joints):
    #   l2d_ref : (br, H,  W )
    #   xz_ref  : (br, Dz, W )
    #   yz_ref  : (br, H,  Dy)
    #   out_ref : (br, 1)
    out2d = l2d_ref[...].astype(jnp.float32)   # (br, H, W)
    xz = xz_ref[...].astype(jnp.float32)       # (br, Dz, W)
    yz = yz_ref[...].astype(jnp.float32)       # (br, H, Dy)

    # ---- spatial max / min reductions -------------------------------------
    # axis=1: sublane-axis reduce (VPU); axis=2: lane-axis reduce (XLU).
    x_map_2d_max = jnp.max(out2d, axis=1)      # (br, W)  torch.max(out2d, dim=2)
    x_map_2d_min = jnp.min(out2d, axis=1)
    x_map_3d_max = jnp.max(xz, axis=1)         # (br, W)  torch.max(xz,    dim=2)
    x_map_3d_min = jnp.min(xz, axis=1)
    y_map_2d_max = jnp.max(out2d, axis=2)      # (br, H)  torch.max(out2d, dim=3)
    y_map_2d_min = jnp.min(out2d, axis=2)
    y_map_3d_max = jnp.max(yz, axis=2)         # (br, H)  torch.max(yz,    dim=3)
    y_map_3d_min = jnp.min(yz, axis=2)

    # ---- squared errors (nn.MSELoss(reduction='none')) --------------------
    ex = ((x_map_2d_max - x_map_3d_max) ** 2
          + (x_map_2d_min - x_map_3d_min) ** 2)            # (br, W)
    ey = ((y_map_2d_max - y_map_3d_max) ** 2
          + (y_map_2d_min - y_map_3d_min) ** 2)            # (br, H)

    # ---- exact per-joint means (sum * 1/len; no MXU truncation) -----------
    inv_w = jnp.float32(1.0 / ex.shape[-1])
    inv_h = jnp.float32(1.0 / ey.shape[-1])
    loss = (jnp.sum(ex, axis=-1, keepdims=True) * inv_w
            + jnp.sum(ey, axis=-1, keepdims=True) * inv_h)  # (br, 1)

    out_ref[...] = loss


def _pick_block_rows(total_rows, max_row_bytes, target_block_bytes=2 * 1024 * 1024):
    """Rows per grid step: ~2 MiB for the largest input, a multiple of 8,
    and >=2 grid steps when there is enough work (v7x has 2 TensorCores)."""
    if total_rows <= 8:
        return total_rows
    br = int(target_block_bytes // max(1, max_row_bytes))
    br = max(8, (br // 8) * 8)
    if br >= total_rows:
        if total_rows >= 16:
            half = ((pl.cdiv(total_rows, 2) + 7) // 8) * 8
            if half < total_rows:
                return half
        return total_rows
    return br


def joints_sum_loss(label2d, output3d_xz, output3d_yz, kernel=None,
                    has_ohkm=False, topk=8, block_rows=None):
    """Pallas implementation of JointsSumLoss.forward.

    `kernel` is accepted for signature parity with the PyTorch module but is
    unused there as well.
    """
    N, C, H, W = label2d.shape
    _, _, Dz, Wxz = output3d_xz.shape
    _, _, Hyz, Dy = output3d_yz.shape
    assert Wxz == W and Hyz == H

    R = N * C
    # Contiguous (free) reshapes; no extra HBM pass.
    l2d = label2d.reshape(R, H, W)
    xz = output3d_xz.reshape(R, Dz, W)
    yz = output3d_yz.reshape(R, Hyz, Dy)

    max_row_bytes = max(H * W * l2d.dtype.itemsize,
                        Dz * W * xz.dtype.itemsize,
                        Hyz * Dy * yz.dtype.itemsize)
    if block_rows is None:
        block_rows = _pick_block_rows(R, max_row_bytes)
    block_rows = int(min(block_rows, R))
    if block_rows < R:
        # Keep the (br, 1) output block's second-minor dim a multiple of 8.
        block_rows = max(8, (block_rows // 8) * 8)
        block_rows = min(block_rows, R)

    grid = (pl.cdiv(R, block_rows),)

    total_in_bytes = (l2d.size * l2d.dtype.itemsize
                      + xz.size * xz.dtype.itemsize
                      + yz.size * yz.dtype.itemsize)
    cost = pl.CostEstimate(
        flops=int(2 * (l2d.size + xz.size + yz.size)),
        transcendentals=0,
        bytes_accessed=int(total_in_bytes + R * 4),
    )

    out = pl.pallas_call(
        _joints_sum_loss_kernel,
        out_shape=jax.ShapeDtypeStruct((R, 1), jnp.float32),
        grid_spec=pltpu.PrefetchScalarGridSpec(
            num_scalar_prefetch=0,
            grid=grid,
            in_specs=[
                pl.BlockSpec((block_rows, H, W), lambda i: (i, 0, 0)),
                pl.BlockSpec((block_rows, Dz, W), lambda i: (i, 0, 0)),
                pl.BlockSpec((block_rows, Hyz, Dy), lambda i: (i, 0, 0)),
            ],
            out_specs=pl.BlockSpec((block_rows, 1), lambda i: (i, 0)),
        ),
        compiler_params=pltpu.CompilerParams(
            dimension_semantics=("parallel",),
            vmem_limit_bytes=32 * 1024 * 1024,
        ),
        cost_estimate=cost,
    )(l2d, xz, yz)

    tmp_loss = out[:, 0].reshape(N, C)

    if has_ohkm:
        topk_val, _ = jax.lax.top_k(tmp_loss, topk)
        loss = jnp.mean(topk_val)
    else:
        loss = jnp.mean(tmp_loss)
    return loss / 100.0


def _reference(label2d, output3d_xz, output3d_yz, has_ohkm=False, topk=8):
    """Pure-JAX reference mirroring the PyTorch forward, for verification."""
    out2d = label2d.astype(jnp.float32)
    xz = output3d_xz.astype(jnp.float32)
    yz = output3d_yz.astype(jnp.float32)
    lx = jnp.mean((jnp.max(out2d, 2) - jnp.max(xz, 2)) ** 2, axis=2)
    ly = jnp.mean((jnp.max(out2d, 3) - jnp.max(yz, 3)) ** 2, axis=2)
    lxm = jnp.mean((jnp.min(out2d, 2) - jnp.min(xz, 2)) ** 2, axis=2)
    lym = jnp.mean((jnp.min(out2d, 3) - jnp.min(yz, 3)) ** 2, axis=2)
    tmp = lx + ly + lxm + lym
    if has_ohkm:
        loss = jnp.mean(jax.lax.top_k(tmp, topk)[0])
    else:
        loss = jnp.mean(tmp)
    return loss / 100.0


if __name__ == "__main__":
    key = jax.random.PRNGKey(0)
    k1, k2, k3, k4, k5, k6, k7 = jax.random.split(key, 7)

    # --- default path -------------------------------------------------------
    N, C, H, W = 2, 4, 16, 16
    label2d = jax.random.uniform(k1, (N, C, H, W), dtype=jnp.float32)
    output3d_xz = jax.random.uniform(k2, (N, C, H, W), dtype=jnp.float32)
    output3d_yz = jax.random.uniform(k3, (N, C, H, W), dtype=jnp.float32)
    # unused `kernel` argument (unused in the PyTorch forward as well)
    dummy_kernel = jax.random.uniform(k4, (C, 1, 3, 3), dtype=jnp.float32)

    loss = joints_sum_loss(label2d, output3d_xz, output3d_yz, dummy_kernel)
    loss = jax.block_until_ready(loss)
    ref = _reference(label2d, output3d_xz, output3d_yz)
    assert jnp.allclose(loss, ref, rtol=1e-5, atol=1e-6), (loss, ref)

    # --- OHKM (top-k) path ----------------------------------------------------
    loss_k = joints_sum_loss(label2d, output3d_xz, output3d_yz, dummy_kernel,
                             has_ohkm=True, topk=2)
    loss_k = jax.block_until_ready(loss_k)
    ref_k = _reference(label2d, output3d_xz, output3d_yz, has_ohkm=True, topk=2)
    assert jnp.allclose(loss_k, ref_k, rtol=1e-5, atol=1e-6), (loss_k, ref_k)

    # --- multi-block grid with a partial trailing block -----------------------
    N2, C2 = 3, 5   # N*C = 15 rows; block_rows=8 -> grid of 2, partial tail
    l2 = jax.random.uniform(k5, (N2, C2, H, W), dtype=jnp.float32)
    x2 = jax.random.uniform(k6, (N2, C2, H, W), dtype=jnp.float32)
    y2 = jax.random.uniform(k7, (N2, C2, H, W), dtype=jnp.float32)
    loss_b = joints_sum_loss(l2, x2, y2, None, block_rows=8)
    loss_b = jax.block_until_ready(loss_b)
    ref_b = _reference(l2, x2, y2)
    assert jnp.allclose(loss_b, ref_b, rtol=1e-5, atol=1e-6), (loss_b, ref_b)

    # TODO(synk): `nms` helper uses .cpu().numpy() and is not part of forward;
    # it is intentionally not ported.
    print("KERNEL_OK")
</pallas_src>

<mosaic_0001>
module attributes {stable_mosaic.version = 11 : i64} {
  func.func @_joints_sum_loss_kernel(%arg0: i32, %arg1: memref<8x16x16xf32, #tpu.memory_space<vmem>>, %arg2: memref<8x16x16xf32, #tpu.memory_space<vmem>>, %arg3: memref<8x16x16xf32, #tpu.memory_space<vmem>>, %arg4: memref<8x1xf32, #tpu.memory_space<vmem>>) attributes {dimension_semantics = [#tpu.dimension_semantics<parallel>], iteration_bounds = array<i64: 1>, scalar_prefetch = 0 : i64, scratch_operands = 0 : i64, tpu.core_type = #tpu.core_type<tc>, window_params = [{transform_indices = @transform_0, window_bounds = array<i64: 8, 16, 16>}, {transform_indices = @transform_1, window_bounds = array<i64: 8, 16, 16>}, {transform_indices = @transform_2, window_bounds = array<i64: 8, 16, 16>}, {transform_indices = @transform_3, window_bounds = array<i64: 8, 1>}]} {
    %c0 = arith.constant 0 : index
    %c0_0 = arith.constant 0 : index
    %c0_1 = arith.constant 0 : index
    %0 = vector.load %arg1[%c0, %c0_0, %c0_1] : memref<8x16x16xf32, #tpu.memory_space<vmem>>, vector<8x16x16xf32>
    %c0_2 = arith.constant 0 : index
    %c0_3 = arith.constant 0 : index
    %c0_4 = arith.constant 0 : index
    %1 = vector.load %arg2[%c0_2, %c0_3, %c0_4] : memref<8x16x16xf32, #tpu.memory_space<vmem>>, vector<8x16x16xf32>
    %c0_5 = arith.constant 0 : index
    %c0_6 = arith.constant 0 : index
    %c0_7 = arith.constant 0 : index
    %2 = vector.load %arg3[%c0_5, %c0_6, %c0_7] : memref<8x16x16xf32, #tpu.memory_space<vmem>>, vector<8x16x16xf32>
    %cst = arith.constant dense<0xFF800000> : vector<8x16xf32>
    %3 = vector.multi_reduction <maximumf>, %0, %cst [1] : vector<8x16x16xf32> to vector<8x16xf32>
    %cst_8 = arith.constant dense<0x7F800000> : vector<8x16xf32>
    %4 = vector.multi_reduction <minimumf>, %0, %cst_8 [1] : vector<8x16x16xf32> to vector<8x16xf32>
    %cst_9 = arith.constant dense<0xFF800000> : vector<8x16xf32>
    %5 = vector.multi_reduction <maximumf>, %1, %cst_9 [1] : vector<8x16x16xf32> to vector<8x16xf32>
    %cst_10 = arith.constant dense<0x7F800000> : vector<8x16xf32>
    %6 = vector.multi_reduction <minimumf>, %1, %cst_10 [1] : vector<8x16x16xf32> to vector<8x16xf32>
    %cst_11 = arith.constant dense<0xFF800000> : vector<8x16xf32>
    %7 = vector.multi_reduction <maximumf>, %0, %cst_11 [2] : vector<8x16x16xf32> to vector<8x16xf32>
    %cst_12 = arith.constant dense<0x7F800000> : vector<8x16xf32>
    %8 = vector.multi_reduction <minimumf>, %0, %cst_12 [2] : vector<8x16x16xf32> to vector<8x16xf32>
    %cst_13 = arith.constant dense<0xFF800000> : vector<8x16xf32>
    %9 = vector.multi_reduction <maximumf>, %2, %cst_13 [2] : vector<8x16x16xf32> to vector<8x16xf32>
    %cst_14 = arith.constant dense<0x7F800000> : vector<8x16xf32>
    %10 = vector.multi_reduction <minimumf>, %2, %cst_14 [2] : vector<8x16x16xf32> to vector<8x16xf32>
    %11 = arith.subf %3, %5 : vector<8x16xf32>
    %12 = arith.mulf %11, %11 : vector<8x16xf32>
    %13 = arith.subf %4, %6 : vector<8x16xf32>
    %14 = arith.mulf %13, %13 : vector<8x16xf32>
    %15 = arith.addf %12, %14 : vector<8x16xf32>
    %16 = arith.subf %7, %9 : vector<8x16xf32>
    %17 = arith.mulf %16, %16 : vector<8x16xf32>
    %18 = arith.subf %8, %10 : vector<8x16xf32>
    %19 = arith.mulf %18, %18 : vector<8x16xf32>
    %20 = arith.addf %17, %19 : vector<8x16xf32>
    %cst_15 = arith.constant dense<0.000000e+00> : vector<8xf32>
    %21 = vector.multi_reduction <add>, %15, %cst_15 [1] : vector<8x16xf32> to vector<8xf32>
    %22 = vector.shape_cast %21 : vector<8xf32> to vector<8x1xf32>
    %cst_16 = arith.constant 6.250000e-02 : f32
    %23 = vector.broadcast %cst_16 : f32 to vector<8x1xf32>
    %24 = arith.mulf %22, %23 : vector<8x1xf32>
    %cst_17 = arith.constant dense<0.000000e+00> : vector<8xf32>
    %25 = vector.multi_reduction <add>, %20, %cst_17 [1] : vector<8x16xf32> to vector<8xf32>
    %26 = vector.shape_cast %25 : vector<8xf32> to vector<8x1xf32>
    %cst_18 = arith.constant 6.250000e-02 : f32
    %27 = vector.broadcast %cst_18 : f32 to vector<8x1xf32>
    %28 = arith.mulf %26, %27 : vector<8x1xf32>
    %29 = arith.addf %24, %28 : vector<8x1xf32>
    %c0_19 = arith.constant 0 : index
    %c0_20 = arith.constant 0 : index
    %30 = vector.load %arg4[%c0_19, %c0_20] : memref<8x1xf32, #tpu.memory_space<vmem>>, vector<8x1xf32>
    tpu.vector_store %arg4[%c0_19, %c0_20], %29 {strides = array<i32>} : memref<8x1xf32, #tpu.memory_space<vmem>>, vector<8x1xf32>,
    return
  }
  func.func @transform_0(%arg0: i32) -> (i32, i32, i32) {
    %c0_i32 = arith.constant 0 : i32
    %c0_i32_0 = arith.constant 0 : i32
    %c0_i32_1 = arith.constant 0 : i32
    return %arg0, %c0_i32, %c0_i32_0 : i32, i32, i32
  }
  func.func @transform_1(%arg0: i32) -> (i32, i32, i32) {
    %c0_i32 = arith.constant 0 : i32
    %c0_i32_0 = arith.constant 0 : i32
    %c0_i32_1 = arith.constant 0 : i32
    return %arg0, %c0_i32, %c0_i32_0 : i32, i32, i32
  }
  func.func @transform_2(%arg0: i32) -> (i32, i32, i32) {
    %c0_i32 = arith.constant 0 : i32
    %c0_i32_0 = arith.constant 0 : i32
    %c0_i32_1 = arith.constant 0 : i32
    return %arg0, %c0_i32, %c0_i32_0 : i32, i32, i32
  }
  func.func @transform_3(%arg0: i32) -> (i32, i32) {
    %c0_i32 = arith.constant 0 : i32
    %c0_i32_0 = arith.constant 0 : i32
    return %arg0, %c0_i32 : i32, i32
  }
}

</mosaic_0001>

<llo_original>
// kernel: tpu_custom_call.1
$region0: #{tpu_custom_call.1}
  #allocation0 [shape = 'u32[]', space=smem, size = 0x4, offset = 0x4, fixed_abs, tag = 'smem constant byte address 0x4 - core index']
  #allocation1 [shape = 'u32[144,128]{1,0:T(1,128)}', space=vmem, size = 0x12000, scoped, tag = 'internal scratch']
  %s0 = inlined_call_operand.hbm [shape: f32[8,16,16], index: 0, kind: input, shape index: {}]
  %s1 = inlined_call_operand.hbm [shape: f32[8,16,16], index: 1, kind: input, shape index: {}]
  %s2 = inlined_call_operand.hbm [shape: f32[8,16,16], index: 2, kind: input, shape index: {}]
  %s3 = inlined_call_operand.vmem [shape: f32[8,1], index: 3, kind: output, shape index: {}]
  %s4 = sld [smem:[#allocation0]]
  $region34: #{tpu_custom_call.1} parent=0
    _
  %s6 = ssub.s32 1, %s4
  %s7 = scalar_select 0, %s6, %s4
  $region1: #{tpu_custom_call.1} parent=0
    #allocation2 [shape = 'u8[65536]{0}', space=vmem, size = 0x10000, scoped, tag = 'input window, operand 0, single buffered']
    #allocation3 [shape = 's32[1]{0}', space=sflag, size = 0x4, scoped, tag = 'scoped memory for tpu_custom_call.1']
    #allocation4 [shape = 'u8[65536]{0}', space=vmem, size = 0x10000, scoped, tag = 'input window, operand 1, single buffered']
    #allocation5 [shape = 's32[1]{0}', space=sflag, size = 0x4, scoped, tag = 'scoped memory for tpu_custom_call.1']
    #allocation6 [shape = 'u8[65536]{0}', space=vmem, size = 0x10000, scoped, tag = 'input window, operand 2, single buffered']
    %8 = vsyncpa [#allocation3], 0
    %9 = vsyncpa [#allocation5], 0
    // Predicated region
    $region2: #{tpu_custom_call.1} parent=1 // pred_check
      _
    $region3: #{tpu_custom_call.1} parent=1 // pred_check_branch
      %11 = sbr.rel (0) target = $region5
    $region4: #{tpu_custom_call.1} parent=1 // pred_region
      %s13 = ssub.s32 2048, 2048
      %14 = vsyncadd [#allocation3], %s13
      %s15 = sshll.u32 [#allocation2], 4
      %s16 = int_to_ptr.vmem [resolvable:$true] %s15
      %21 = dma.hbm_to_vmem [thread:$0]  %s0, 2048, %s16, [#allocation3], 128, 128, 8
    $region5: #{tpu_custom_call.1} parent=1 // pred_fallthru
      _
    // Predicated region
    $region6: #{tpu_custom_call.1} parent=1 // pred_check
      _
    $region7: #{tpu_custom_call.1} parent=1 // pred_check_branch
      %23 = sbr.rel (0) target = $region9
    $region8: #{tpu_custom_call.1} parent=1 // pred_region
      %s25 = ssub.s32 2048, 2048
      %26 = vsyncadd [#allocation5], %s25
      %s27 = sshll.u32 [#allocation4], 4
      %s28 = int_to_ptr.vmem [resolvable:$true] %s27
      %33 = dma.hbm_to_vmem [thread:$0]  %s1, 2048, %s28, [#allocation5], 128, 128, 8
    $region9: #{tpu_custom_call.1} parent=1 // pred_fallthru
      _
    // Predicated region
    $region10: #{tpu_custom_call.1} parent=1 // pred_check
      _
    $region11: #{tpu_custom_call.1} parent=1 // pred_check_branch
      %35 = sbr.rel (0) target = $region13
    $region12: #{tpu_custom_call.1} parent=1 // pred_region
      %s37 = ssub.s32 2048, 2048
      %38 = vsyncadd [#allocation5], %s37
      %s39 = sshll.u32 [#allocation6], 4
      %s40 = int_to_ptr.vmem [resolvable:$true] %s39
      %45 = dma.hbm_to_vmem [thread:$0]  %s2, 2048, %s40, [#allocation5], 128, 128, 8
    $region13: #{tpu_custom_call.1} parent=1 // pred_fallthru
      _
    // Predicated region
    $region14: #{tpu_custom_call.1} parent=1 // pred_check
      _
    $region15: #{tpu_custom_call.1} parent=1 // pred_check_branch
      %47 = sbr.rel (0) target = $region17
    $region16: #{tpu_custom_call.1} parent=1 // pred_region
      %48 = dma.done [#allocation3], 2048
    $region17: #{tpu_custom_call.1} parent=1 // pred_fallthru
      _
    // Predicated region
    $region18: #{tpu_custom_call.1} parent=1 // pred_check
      _
    $region19: #{tpu_custom_call.1} parent=1 // pred_check_branch
      %50 = sbr.rel (0) target = $region21
    $region20: #{tpu_custom_call.1} parent=1 // pred_region
      %51 = dma.done [#allocation5], 2048
    $region21: #{tpu_custom_call.1} parent=1 // pred_fallthru
      _
    // Predicated region
    $region22: #{tpu_custom_call.1} parent=1 // pred_check
      _
    $region23: #{tpu_custom_call.1} parent=1 // pred_check_branch
      %53 = sbr.rel (0) target = $region25
    $region24: #{tpu_custom_call.1} parent=1 // pred_region
      %54 = dma.done [#allocation5], 2048
    $region25: #{tpu_custom_call.1} parent=1 // pred_fallthru
      _
    %v55 = vld [vmem:[#allocation2] sm:$0xff]
    %v56 = vld [vmem:[#allocation2 + $0x8] sm:$0xff]
    %v57 = vld [vmem:[#allocation2 + $0x10] sm:$0xff]
    %v58 = vld [vmem:[#allocation2 + $0x18] sm:$0xff]
    %v59 = vld [vmem:[#allocation2 + $0x20] sm:$0xff]
    %v60 = vld [vmem:[#allocation2 + $0x28] sm:$0xff]
    %v61 = vld [vmem:[#allocation2 + $0x30] sm:$0xff]
    %v62 = vld [vmem:[#allocation2 + $0x38] sm:$0xff]
    %v63 = vld [vmem:[#allocation2 + $0x40] sm:$0xff]
    %v64 = vld [vmem:[#allocation2 + $0x48] sm:$0xff]
    %v65 = vld [vmem:[#allocation2 + $0x50] sm:$0xff]
    %v66 = vld [vmem:[#allocation2 + $0x58] sm:$0xff]
    %v67 = vld [vmem:[#allocation2 + $0x60] sm:$0xff]
    %v68 = vld [vmem:[#allocation2 + $0x68] sm:$0xff]
    %v69 = vld [vmem:[#allocation2 + $0x70] sm:$0xff]
    %v70 = vld [vmem:[#allocation2 + $0x78] sm:$0xff]
    %v71 = vld [vmem:[#allocation4] sm:$0xff]
    %v72 = vld [vmem:[#allocation4 + $0x8] sm:$0xff]
    %v73 = vld [vmem:[#allocation4 + $0x10] sm:$0xff]
    %v74 = vld [vmem:[#allocation4 + $0x18] sm:$0xff]
    %v75 = vld [vmem:[#allocation4 + $0x20] sm:$0xff]
    %v76 = vld [vmem:[#allocation4 + $0x28] sm:$0xff]
    %v77 = vld [vmem:[#allocation4 + $0x30] sm:$0xff]
    %v78 = vld [vmem:[#allocation4 + $0x38] sm:$0xff]
    %v79 = vld [vmem:[#allocation4 + $0x40] sm:$0xff]
    %v80 = vld [vmem:[#allocation4 + $0x48] sm:$0xff]
    %v81 = vld [vmem:[#allocation4 + $0x50] sm:$0xff]
    %v82 = vld [vmem:[#allocation4 + $0x58] sm:$0xff]
    %v83 = vld [vmem:[#allocation4 + $0x60] sm:$0xff]
    %v84 = vld [vmem:[#allocation4 + $0x68] sm:$0xff]
    %v85 = vld [vmem:[#allocation4 + $0x70] sm:$0xff]
    %v86 = vld [vmem:[#allocation4 + $0x78] sm:$0xff]
    %v87 = vld [vmem:[#allocation6] sm:$0xff]
    %v88 = vld [vmem:[#allocation6 + $0x8] sm:$0xff]
    %v89 = vld [vmem:[#allocation6 + $0x10] sm:$0xff]
    %v90 = vld [vmem:[#allocation6 + $0x18] sm:$0xff]
    %v91 = vld [vmem:[#allocation6 + $0x20] sm:$0xff]
    %v92 = vld [vmem:[#allocation6 + $0x28] sm:$0xff]
    %v93 = vld [vmem:[#allocation6 + $0x30] sm:$0xff]
    %v94 = vld [vmem:[#allocation6 + $0x38] sm:$0xff]
    %v95 = vld [vmem:[#allocation6 + $0x40] sm:$0xff]
    %v96 = vld [vmem:[#allocation6 + $0x48] sm:$0xff]
    %v97 = vld [vmem:[#allocation6 + $0x50] sm:$0xff]
    %v98 = vld [vmem:[#allocation6 + $0x58] sm:$0xff]
    %v99 = vld [vmem:[#allocation6 + $0x60] sm:$0xff]
    %v100 = vld [vmem:[#allocation6 + $0x68] sm:$0xff]
    %v101 = vld [vmem:[#allocation6 + $0x70] sm:$0xff]
    %v102 = vld [vmem:[#allocation6 + $0x78] sm:$0xff]
    %vm103 = vcmask 130048
    %v104 = vsel %vm103, %v55, -inf
    %v105 = vsel %vm103, %v56, -inf
    %v106 = vmax.f32 %v104, %v105
    %v107 = vrot.slane %v106, 4
    %v108 = vmax.f32 %v106, %v107
    %v109 = vrot.slane %v108, 2
    %v110 = vmax.f32 %v108, %v109
    %v111 = vrot.slane %v110, 1
    %v112 = vmax.f32 %v110, %v111
    %v113 = vsel %vm103, %v57, -inf
    %v114 = vsel %vm103, %v58, -inf
    %v115 = vmax.f32 %v113, %v114
    %v116 = vrot.slane %v115, 4
    %v117 = vmax.f32 %v115, %v116
    %v118 = vrot.slane %v117, 2
    %v119 = vmax.f32 %v117, %v118
    %v120 = vrot.slane %v119, 1
    %v121 = vmax.f32 %v119, %v120
    %v122 = vsel %vm103, %v59, -inf
    %v123 = vsel %vm103, %v60, -inf
    %v124 = vmax.f32 %v122, %v123
    %v125 = vrot.slane %v124, 4
    %v126 = vmax.f32 %v124, %v125
    %v127 = vrot.slane %v126, 2
    %v128 = vmax.f32 %v126, %v127
    %v129 = vrot.slane %v128, 1
    %v130 = vmax.f32 %v128, %v129
    %v131 = vsel %vm103, %v61, -inf
    %v132 = vsel %vm103, %v62, -inf
    %v133 = vmax.f32 %v131, %v132
    %v134 = vrot.slane %v133, 4
    %v135 = vmax.f32 %v133, %v134
    %v136 = vrot.slane %v135, 2
    %v137 = vmax.f32 %v135, %v136
    %v138 = vrot.slane %v137, 1
    %v139 = vmax.f32 %v137, %v138
    %v140 = vsel %vm103, %v63, -inf
    %v141 = vsel %vm103, %v64, -inf
    %v142 = vmax.f32 %v140, %v141
    %v143 = vrot.slane %v142, 4
    %v144 = vmax.f32 %v142, %v143
    %v145 = vrot.slane %v144, 2
    %v146 = vmax.f32 %v144, %v145
    %v147 = vrot.slane %v146, 1
    %v148 = vmax.f32 %v146, %v147
    %v149 = vsel %vm103, %v65, -inf
    %v150 = vsel %vm103, %v66, -inf
    %v151 = vmax.f32 %v149, %v150
    %v152 = vrot.slane %v151, 4
    %v153 = vmax.f32 %v151, %v152
    %v154 = vrot.slane %v153, 2
    %v155 = vmax.f32 %v153, %v154
    %v156 = vrot.slane %v155, 1
    %v157 = vmax.f32 %v155, %v156
    %v158 = vsel %vm103, %v67, -inf
    %v159 = vsel %vm103, %v68, -inf
    %v160 = vmax.f32 %v158, %v159
    %v161 = vrot.slane %v160, 4
    %v162 = vmax.f32 %v160, %v161
    %v163 = vrot.slane %v162, 2
    %v164 = vmax.f32 %v162, %v163
    %v165 = vrot.slane %v164, 1
    %v166 = vmax.f32 %v164, %v165
    %v167 = vsel %vm103, %v69, -inf
    %v168 = vsel %vm103, %v70, -inf
    %v169 = vmax.f32 %v167, %v168
    %v170 = vrot.slane %v169, 4
    %v171 = vmax.f32 %v169, %v170
    %v172 = vrot.slane %v171, 2
    %v173 = vmax.f32 %v171, %v172
    %v174 = vrot.slane %v173, 1
    %v175 = vmax.f32 %v173, %v174
    %v176 = vsel %vm103, %v55, inf
    %v177 = vsel %vm103, %v56, inf
    %v178 = vmin.f32 %v176, %v177
    %v179 = vrot.slane %v178, 4
    %v180 = vmin.f32 %v178, %v179
    %v181 = vrot.slane %v180, 2
    %v182 = vmin.f32 %v180, %v181
    %v183 = vrot.slane %v182, 1
    %v184 = vmin.f32 %v182, %v183
    %v185 = vsel %vm103, %v57, inf
    %v186 = vsel %vm103, %v58, inf
    %v187 = vmin.f32 %v185, %v186
    %v188 = vrot.slane %v187, 4
    %v189 = vmin.f32 %v187, %v188
    %v190 = vrot.slane %v189, 2
    %v191 = vmin.f32 %v189, %v190
    %v192 = vrot.slane %v191, 1
    %v193 = vmin.f32 %v191, %v192
    %v194 = vsel %vm103, %v59, inf
    %v195 = vsel %vm103, %v60, inf
    %v196 = vmin.f32 %v194, %v195
    %v197 = vrot.slane %v196, 4
    %v198 = vmin.f32 %v196, %v197
    %v199 = vrot.slane %v198, 2
    %v200 = vmin.f32 %v198, %v199
    %v201 = vrot.slane %v200, 1
    %v202 = vmin.f32 %v200, %v201
    %v203 = vsel %vm103, %v61, inf
    %v204 = vsel %vm103, %v62, inf
    %v205 = vmin.f32 %v203, %v204
    %v206 = vrot.slane %v205, 4
    %v207 = vmin.f32 %v205, %v206
    %v208 = vrot.slane %v207, 2
    %v209 = vmin.f32 %v207, %v208
    %v210 = vrot.slane %v209, 1
    %v211 = vmin.f32 %v209, %v210
    %v212 = vsel %vm103, %v63, inf
    %v213 = vsel %vm103, %v64, inf
    %v214 = vmin.f32 %v212, %v213
    %v215 = vrot.slane %v214, 4
    %v216 = vmin.f32 %v214, %v215
    %v217 = vrot.slane %v216, 2
    %v218 = vmin.f32 %v216, %v217
    %v219 = vrot.slane %v218, 1
    %v220 = vmin.f32 %v218, %v219
    %v221 = vsel %vm103, %v65, inf
    %v222 = vsel %vm103, %v66, inf
    %v223 = vmin.f32 %v221, %v222
    %v224 = vrot.slane %v223, 4
    %v225 = vmin.f32 %v223, %v224
    %v226 = vrot.slane %v225, 2
    %v227 = vmin.f32 %v225, %v226
    %v228 = vrot.slane %v227, 1
    %v229 = vmin.f32 %v227, %v228
    %v230 = vsel %vm103, %v67, inf
    %v231 = vsel %vm103, %v68, inf
    %v232 = vmin.f32 %v230, %v231
    %v233 = vrot.slane %v232, 4
    %v234 = vmin.f32 %v232, %v233
    %v235 = vrot.slane %v234, 2
    %v236 = vmin.f32 %v234, %v235
    %v237 = vrot.slane %v236, 1
    %v238 = vmin.f32 %v236, %v237
    %v239 = vsel %vm103, %v69, inf
    %v240 = vsel %vm103, %v70, inf
    %v241 = vmin.f32 %v239, %v240
    %v242 = vrot.slane %v241, 4
    %v243 = vmin.f32 %v241, %v242
    %v244 = vrot.slane %v243, 2
    %v245 = vmin.f32 %v243, %v244
    %v246 = vrot.slane %v245, 1
    %v247 = vmin.f32 %v245, %v246
    %v248 = vsel %vm103, %v71, -inf
    %v249 = vsel %vm103, %v72, -inf
    %v250 = vmax.f32 %v248, %v249
    %v251 = vrot.slane %v250, 4
    %v252 = vmax.f32 %v250, %v251
    %v253 = vrot.slane %v252, 2
    %v254 = vmax.f32 %v252, %v253
    %v255 = vrot.slane %v254, 1
    %v256 = vmax.f32 %v254, %v255
    %v257 = vsel %vm103, %v73, -inf
    %v258 = vsel %vm103, %v74, -inf
    %v259 = vmax.f32 %v257, %v258
    %v260 = vrot.slane %v259, 4
    %v261 = vmax.f32 %v259, %v260
    %v262 = vrot.slane %v261, 2
    %v263 = vmax.f32 %v261, %v262
    %v264 = vrot.slane %v263, 1
    %v265 = vmax.f32 %v263, %v264
    %v266 = vsel %vm103, %v75, -inf
    %v267 = vsel %vm103, %v76, -inf
    %v268 = vmax.f32 %v266, %v267
    %v269 = vrot.slane %v268, 4
    %v270 = vmax.f32 %v268, %v269
    %v271 = vrot.slane %v270, 2
    %v272 = vmax.f32 %v270, %v271
    %v273 = vrot.slane %v272, 1
    %v274 = vmax.f32 %v272, %v273
    %v275 = vsel %vm103, %v77, -inf
    %v276 = vsel %vm103, %v78, -inf
    %v277 = vmax.f32 %v275, %v276
    %v278 = vrot.slane %v277, 4
    %v279 = vmax.f32 %v277, %v278
    %v280 = vrot.slane %v279, 2
    %v281 = vmax.f32 %v279, %v280
    %v282 = vrot.slane %v281, 1
    %v283 = vmax.f32 %v281, %v282
    %v284 = vsel %vm103, %v79, -inf
    %v285 = vsel %vm103, %v80, -inf
    %v286 = vmax.f32 %v284, %v285
    %v287 = vrot.slane %v286, 4
    %v288 = vmax.f32 %v286, %v287
    %v289 = vrot.slane %v288, 2
    %v290 = vmax.f32 %v288, %v289
    %v291 = vrot.slane %v290, 1
    %v292 = vmax.f32 %v290, %v291
    %v293 = vsel %vm103, %v81, -inf
    %v294 = vsel %vm103, %v82, -inf
    %v295 = vmax.f32 %v293, %v294
    %v296 = vrot.slane %v295, 4
    %v297 = vmax.f32 %v295, %v296
    %v298 = vrot.slane %v297, 2
    %v299 = vmax.f32 %v297, %v298
    %v300 = vrot.slane %v299, 1
    %v301 = vmax.f32 %v299, %v300
    %v302 = vsel %vm103, %v83, -inf
    %v303 = vsel %vm103, %v84, -inf
    %v304 = vmax.f32 %v302, %v303
    %v305 = vrot.slane %v304, 4
    %v306 = vmax.f32 %v304, %v305
    %v307 = vrot.slane %v306, 2
    %v308 = vmax.f32 %v306, %v307
    %v309 = vrot.slane %v308, 1
    %v310 = vmax.f32 %v308, %v309
    %v311 = vsel %vm103, %v85, -inf
    %v312 = vsel %vm103, %v86, -inf
    %v313 = vmax.f32 %v311, %v312
    %v314 = vrot.slane %v313, 4
    %v315 = vmax.f32 %v313, %v314
    %v316 = vrot.slane %v315, 2
    %v317 = vmax.f32 %v315, %v316
    %v318 = vrot.slane %v317, 1
    %v319 = vmax.f32 %v317, %v318
    %v320 = vsel %vm103, %v71, inf
    %v321 = vsel %vm103, %v72, inf
    %v322 = vmin.f32 %v320, %v321
    %v323 = vrot.slane %v322, 4
    %v324 = vmin.f32 %v322, %v323
    %v325 = vrot.slane %v324, 2
    %v326 = vmin.f32 %v324, %v325
    %v327 = vrot.slane %v326, 1
    %v328 = vmin.f32 %v326, %v327
    %v329 = vsel %vm103, %v73, inf
    %v330 = vsel %vm103, %v74, inf
    %v331 = vmin.f32 %v329, %v330
    %v332 = vrot.slane %v331, 4
    %v333 = vmin.f32 %v331, %v332
    %v334 = vrot.slane %v333, 2
    %v335 = vmin.f32 %v333, %v334
    %v336 = vrot.slane %v335, 1
    %v337 = vmin.f32 %v335, %v336
    %v338 = vsel %vm103, %v75, inf
    %v339 = vsel %vm103, %v76, inf
    %v340 = vmin.f32 %v338, %v339
    %v341 = vrot.slane %v340, 4
    %v342 = vmin.f32 %v340, %v341
    %v343 = vrot.slane %v342, 2
    %v344 = vmin.f32 %v342, %v343
    %v345 = vrot.slane %v344, 1
    %v346 = vmin.f32 %v344, %v345
    %v347 = vsel %vm103, %v77, inf
    %v348 = vsel %vm103, %v78, inf
    %v349 = vmin.f32 %v347, %v348
    %v350 = vrot.slane %v349, 4
    %v351 = vmin.f32 %v349, %v350
    %v352 = vrot.slane %v351, 2
    %v353 = vmin.f32 %v351, %v352
    %v354 = vrot.slane %v353, 1
    %v355 = vmin.f32 %v353, %v354
    %v356 = vsel %vm103, %v79, inf
    %v357 = vsel %vm103, %v80, inf
    %v358 = vmin.f32 %v356, %v357
    %v359 = vrot.slane %v358, 4
    %v360 = vmin.f32 %v358, %v359
    %v361 = vrot.slane %v360, 2
    %v362 = vmin.f32 %v360, %v361
    %v363 = vrot.slane %v362, 1
    %v364 = vmin.f32 %v362, %v363
    %v365 = vsel %vm103, %v81, inf
    %v366 = vsel %vm103, %v82, inf
    %v367 = vmin.f32 %v365, %v366
    %v368 = vrot.slane %v367, 4
    %v369 = vmin.f32 %v367, %v368
    %v370 = vrot.slane %v369, 2
    %v371 = vmin.f32 %v369, %v370
    %v372 = vrot.slane %v371, 1
    %v373 = vmin.f32 %v371, %v372
    %v374 = vsel %vm103, %v83, inf
    %v375 = vsel %vm103, %v84, inf
    %v376 = vmin.f32 %v374, %v375
    %v377 = vrot.slane %v376, 4
    %v378 = vmin.f32 %v376, %v377
    %v379 = vrot.slane %v378, 2
    %v380 = vmin.f32 %v378, %v379
    %v381 = vrot.slane %v380, 1
    %v382 = vmin.f32 %v380, %v381
    %v383 = vsel %vm103, %v85, inf
    %v384 = vsel %vm103, %v86, inf
    %v385 = vmin.f32 %v383, %v384
    %v386 = vrot.slane %v385, 4
    %v387 = vmin.f32 %v385, %v386
    %v388 = vrot.slane %v387, 2
    %v389 = vmin.f32 %v387, %v388
    %v390 = vrot.slane %v389, 1
    %v391 = vmin.f32 %v389, %v390
    %392 = vmax.xlane.f32.xlu0 %v104
    %v393 = vpop.xlane.xlu0 %392
    %394 = vmax.xlane.f32.xlu0 %v105
    %v395 = vpop.xlane.xlu0 %394
    %396 = vmax.xlane.f32.xlu0 %v113
    %v397 = vpop.xlane.xlu0 %396
    %398 = vmax.xlane.f32.xlu0 %v114
    %v399 = vpop.xlane.xlu0 %398
    %400 = vmax.xlane.f32.xlu0 %v122
    %v401 = vpop.xlane.xlu0 %400
    %402 = vmax.xlane.f32.xlu0 %v123
    %v403 = vpop.xlane.xlu0 %402
    %404 = vmax.xlane.f32.xlu0 %v131
    %v405 = vpop.xlane.xlu0 %404
    %406 = vmax.xlane.f32.xlu0 %v132
    %v407 = vpop.xlane.xlu0 %406
    %408 = vmax.xlane.f32.xlu0 %v140
    %v409 = vpop.xlane.xlu0 %408
    %410 = vmax.xlane.f32.xlu0 %v141
    %v411 = vpop.xlane.xlu0 %410
    %412 = vmax.xlane.f32.xlu0 %v149
    %v413 = vpop.xlane.xlu0 %412
    %414 = vmax.xlane.f32.xlu0 %v150
    %v415 = vpop.xlane.xlu0 %414
    %416 = vmax.xlane.f32.xlu0 %v158
    %v417 = vpop.xlane.xlu0 %416
    %418 = vmax.xlane.f32.xlu0 %v159
    %v419 = vpop.xlane.xlu0 %418
    %420 = vmax.xlane.f32.xlu0 %v167
    %v421 = vpop.xlane.xlu0 %420
    %422 = vmax.xlane.f32.xlu0 %v168
    %v423 = vpop.xlane.xlu0 %422
    %424 = vmin.xlane.f32.xlu0 %v176
    %v425 = vpop.xlane.xlu0 %424
    %426 = vmin.xlane.f32.xlu0 %v177
    %v427 = vpop.xlane.xlu0 %426
    %428 = vmin.xlane.f32.xlu0 %v185
    %v429 = vpop.xlane.xlu0 %428
    %430 = vmin.xlane.f32.xlu0 %v186
    %v431 = vpop.xlane.xlu0 %430
    %432 = vmin.xlane.f32.xlu0 %v194
    %v433 = vpop.xlane.xlu0 %432
    %434 = vmin.xlane.f32.xlu0 %v195
    %v435 = vpop.xlane.xlu0 %434
    %436 = vmin.xlane.f32.xlu0 %v203
    %v437 = vpop.xlane.xlu0 %436
    %438 = vmin.xlane.f32.xlu0 %v204
    %v439 = vpop.xlane.xlu0 %438
    %440 = vmin.xlane.f32.xlu0 %v212
    %v441 = vpop.xlane.xlu0 %440
    %442 = vmin.xlane.f32.xlu0 %v213
    %v443 = vpop.xlane.xlu0 %442
    %444 = vmin.xlane.f32.xlu0 %v221
    %v445 = vpop.xlane.xlu0 %444
    %446 = vmin.xlane.f32.xlu0 %v222
    %v447 = vpop.xlane.xlu0 %446
    %448 = vmin.xlane.f32.xlu0 %v230
    %v449 = vpop.xlane.xlu0 %448
    %450 = vmin.xlane.f32.xlu0 %v231
    %v451 = vpop.xlane.xlu0 %450
    %452 = vmin.xlane.f32.xlu0 %v239
    %v453 = vpop.xlane.xlu0 %452
    %454 = vmin.xlane.f32.xlu0 %v240
    %v455 = vpop.xlane.xlu0 %454
    %v456 = vsel %vm103, %v87, -inf
    %457 = vmax.xlane.f32.xlu0 %v456
    %v458 = vpop.xlane.xlu0 %457
    %v459 = vsel %vm103, %v88, -inf
    %460 = vmax.xlane.f32.xlu0 %v459
    %v461 = vpop.xlane.xlu0 %460
    %v462 = vsel %vm103, %v89, -inf
    %463 = vmax.xlane.f32.xlu0 %v462
    %v464 = vpop.xlane.xlu0 %463
    %v465 = vsel %vm103, %v90, -inf
    %466 = vmax.xlane.f32.xlu0 %v465
    %v467 = vpop.xlane.xlu0 %466
    %v468 = vsel %vm103, %v91, -inf
    %469 = vmax.xlane.f32.xlu0 %v468
    %v470 = vpop.xlane.xlu0 %469
    %v471 = vsel %vm103, %v92, -inf
    %472 = vmax.xlane.f32.xlu0 %v471
    %v473 = vpop.xlane.xlu0 %472
    %v474 = vsel %vm103, %v93, -inf
    %475 = vmax.xlane.f32.xlu0 %v474
    %v476 = vpop.xlane.xlu0 %475
    %v477 = vsel %vm103, %v94, -inf
    %478 = vmax.xlane.f32.xlu0 %v477
    %v479 = vpop.xlane.xlu0 %478
    %v480 = vsel %vm103, %v95, -inf
    %481 = vmax.xlane.f32.xlu0 %v480
    %v482 = vpop.xlane.xlu0 %481
    %v483 = vsel %vm103, %v96, -inf
    %484 = vmax.xlane.f32.xlu0 %v483
    %v485 = vpop.xlane.xlu0 %484
    %v486 = vsel %vm103, %v97, -inf
    %487 = vmax.xlane.f32.xlu0 %v486
    %v488 = vpop.xlane.xlu0 %487
    %v489 = vsel %vm103, %v98, -inf
    %490 = vmax.xlane.f32.xlu0 %v489
    %v491 = vpop.xlane.xlu0 %490
    %v492 = vsel %vm103, %v99, -inf
    %493 = vmax.xlane.f32.xlu0 %v492
    %v494 = vpop.xlane.xlu0 %493
    %v495 = vsel %vm103, %v100, -inf
    %496 = vmax.xlane.f32.xlu0 %v495
    %v497 = vpop.xlane.xlu0 %496
    %v498 = vsel %vm103, %v101, -inf
    %499 = vmax.xlane.f32.xlu0 %v498
    %v500 = vpop.xlane.xlu0 %499
    %v501 = vsel %vm103, %v102, -inf
    %502 = vmax.xlane.f32.xlu0 %v501
    %v503 = vpop.xlane.xlu0 %502
    %v504 = vsel %vm103, %v87, inf
    %505 = vmin.xlane.f32.xlu0 %v504
    %v506 = vpop.xlane.xlu0 %505
    %v507 = vsel %vm103, %v88, inf
    %508 = vmin.xlane.f32.xlu0 %v507
    %v509 = vpop.xlane.xlu0 %508
    %v510 = vsel %vm103, %v89, inf
    %511 = vmin.xlane.f32.xlu0 %v510
    %v512 = vpop.xlane.xlu0 %511
    %v513 = vsel %vm103, %v90, inf
    %514 = vmin.xlane.f32.xlu0 %v513
    %v515 = vpop.xlane.xlu0 %514
    %v516 = vsel %vm103, %v91, inf
    %517 = vmin.xlane.f32.xlu0 %v516
    %v518 = vpop.xlane.xlu0 %517
    %v519 = vsel %vm103, %v92, inf
    %520 = vmin.xlane.f32.xlu0 %v519
    %v521 = vpop.xlane.xlu0 %520
    %v522 = vsel %vm103, %v93, inf
    %523 = vmin.xlane.f32.xlu0 %v522
    %v524 = vpop.xlane.xlu0 %523
    %v525 = vsel %vm103, %v94, inf
    %526 = vmin.xlane.f32.xlu0 %v525
    %v527 = vpop.xlane.xlu0 %526
    %v528 = vsel %vm103, %v95, inf
    %529 = vmin.xlane.f32.xlu0 %v528
    %v530 = vpop.xlane.xlu0 %529
    %v531 = vsel %vm103, %v96, inf
    %532 = vmin.xlane.f32.xlu0 %v531
    %v533 = vpop.xlane.xlu0 %532
    %v534 = vsel %vm103, %v97, inf
    %535 = vmin.xlane.f32.xlu0 %v534
    %v536 = vpop.xlane.xlu0 %535
    %v537 = vsel %vm103, %v98, inf
    %538 = vmin.xlane.f32.xlu0 %v537
    %v539 = vpop.xlane.xlu0 %538
    %v540 = vsel %vm103, %v99, inf
    %541 = vmin.xlane.f32.xlu0 %v540
    %v542 = vpop.xlane.xlu0 %541
    %v543 = vsel %vm103, %v100, inf
    %544 = vmin.xlane.f32.xlu0 %v543
    %v545 = vpop.xlane.xlu0 %544
    %v546 = vsel %vm103, %v101, inf
    %547 = vmin.xlane.f32.xlu0 %v546
    %v548 = vpop.xlane.xlu0 %547
    %v549 = vsel %vm103, %v102, inf
    %550 = vmin.xlane.f32.xlu0 %v549
    %v551 = vpop.xlane.xlu0 %550
    %v552 = vsub.f32 %v112, %v256
    %v553 = vsub.f32 %v121, %v265
    %v554 = vsub.f32 %v130, %v274
    %v555 = vsub.f32 %v139, %v283
    %v556 = vsub.f32 %v148, %v292
    %v557 = vsub.f32 %v157, %v301
    %v558 = vsub.f32 %v166, %v310
    %v559 = vsub.f32 %v175, %v319
    %v560 = vmul.f32 %v552, %v552
    %v561 = vmul.f32 %v553, %v553
    %v562 = vmul.f32 %v554, %v554
    %v563 = vmul.f32 %v555, %v555
    %v564 = vmul.f32 %v556, %v556
    %v565 = vmul.f32 %v557, %v557
    %v566 = vmul.f32 %v558, %v558
    %v567 = vmul.f32 %v559, %v559
    %v568 = vsub.f32 %v184, %v328
    %v569 = vsub.f32 %v193, %v337
    %v570 = vsub.f32 %v202, %v346
    %v571 = vsub.f32 %v211, %v355
    %v572 = vsub.f32 %v220, %v364
    %v573 = vsub.f32 %v229, %v373
    %v574 = vsub.f32 %v238, %v382
    %v575 = vsub.f32 %v247, %v391
    %v576 = vmul.f32 %v568, %v568
    %v577 = vmul.f32 %v569, %v569
    %v578 = vmul.f32 %v570, %v570
    %v579 = vmul.f32 %v571, %v571
    %v580 = vmul.f32 %v572, %v572
    %v581 = vmul.f32 %v573, %v573
    %v582 = vmul.f32 %v574, %v574
    %v583 = vmul.f32 %v575, %v575
    %v584 = vadd.f32 %v560, %v576
    %v585 = vadd.f32 %v561, %v577
    %v586 = vadd.f32 %v562, %v578
    %v587 = vadd.f32 %v563, %v579
    %v588 = vadd.f32 %v564, %v580
    %v589 = vadd.f32 %v565, %v581
    %v590 = vadd.f32 %v566, %v582
    %v591 = vadd.f32 %v567, %v583
    %v592 = vsub.f32 %v393, %v458
    %v593 = vsub.f32 %v395, %v461
    %v594 = vsub.f32 %v397, %v464
    %v595 = vsub.f32 %v399, %v467
    %v596 = vsub.f32 %v401, %v470
    %v597 = vsub.f32 %v403, %v473
    %v598 = vsub.f32 %v405, %v476
    %v599 = vsub.f32 %v407, %v479
    %v600 = vsub.f32 %v409, %v482
    %v601 = vsub.f32 %v411, %v485
    %v602 = vsub.f32 %v413, %v488
    %v603 = vsub.f32 %v415, %v491
    %v604 = vsub.f32 %v417, %v494
    %v605 = vsub.f32 %v419, %v497
    %v606 = vsub.f32 %v421, %v500
    %v607 = vsub.f32 %v423, %v503
    %v608 = vmul.f32 %v592, %v592
    %v609 = vmul.f32 %v593, %v593
    %v610 = vmul.f32 %v594, %v594
    %v611 = vmul.f32 %v595, %v595
    %v612 = vmul.f32 %v596, %v596
    %v613 = vmul.f32 %v597, %v597
    %v614 = vmul.f32 %v598, %v598
    %v615 = vmul.f32 %v599, %v599
    %v616 = vmul.f32 %v600, %v600
    %v617 = vmul.f32 %v601, %v601
    %v618 = vmul.f32 %v602, %v602
    %v619 = vmul.f32 %v603, %v603
    %v620 = vmul.f32 %v604, %v604
    %v621 = vmul.f32 %v605, %v605
    %v622 = vmul.f32 %v606, %v606
    %v623 = vmul.f32 %v607, %v607
    %v624 = vsub.f32 %v425, %v506
    %v625 = vsub.f32 %v427, %v509
    %v626 = vsub.f32 %v429, %v512
    %v627 = vsub.f32 %v431, %v515
    %v628 = vsub.f32 %v433, %v518
    %v629 = vsub.f32 %v435, %v521
    %v630 = vsub.f32 %v437, %v524
    %v631 = vsub.f32 %v439, %v527
    %v632 = vsub.f32 %v441, %v530
    %v633 = vsub.f32 %v443, %v533
    %v634 = vsub.f32 %v445, %v536
    %v635 = vsub.f32 %v447, %v539
    %v636 = vsub.f32 %v449, %v542
    %v637 = vsub.f32 %v451, %v545
    %v638 = vsub.f32 %v453, %v548
    %v639 = vsub.f32 %v455, %v551
    %v640 = vmul.f32 %v624, %v624
    %v641 = vmul.f32 %v625, %v625
    %v642 = vmul.f32 %v626, %v626
    %v643 = vmul.f32 %v627, %v627
    %v644 = vmul.f32 %v628, %v628
    %v645 = vmul.f32 %v629, %v629
    %v646 = vmul.f32 %v630, %v630
    %v647 = vmul.f32 %v631, %v631
    %v648 = vmul.f32 %v632, %v632
    %v649 = vmul.f32 %v633, %v633
    %v650 = vmul.f32 %v634, %v634
    %v651 = vmul.f32 %v635, %v635
    %v652 = vmul.f32 %v636, %v636
    %v653 = vmul.f32 %v637, %v637
    %v654 = vmul.f32 %v638, %v638
    %v655 = vmul.f32 %v639, %v639
    %v656 = vadd.f32 %v608, %v640
    %v657 = vadd.f32 %v609, %v641
    %v658 = vadd.f32 %v610, %v642
    %v659 = vadd.f32 %v611, %v643
    %v660 = vadd.f32 %v612, %v644
    %v661 = vadd.f32 %v613, %v645
    %v662 = vadd.f32 %v614, %v646
    %v663 = vadd.f32 %v615, %v647
    %v664 = vadd.f32 %v616, %v648
    %v665 = vadd.f32 %v617, %v649
    %v666 = vadd.f32 %v618, %v650
    %v667 = vadd.f32 %v619, %v651
    %v668 = vadd.f32 %v620, %v652
    %v669 = vadd.f32 %v621, %v653
    %v670 = vadd.f32 %v622, %v654
    %v671 = vadd.f32 %v623, %v655
    %vm680 = vcmask 1041409
    %v681 = vsel %vm680, %v585, %v584
    %vm682 = vcmask 1042434
    %v683 = vsel %vm682, %v586, %v681
    %vm684 = vcmask 1043459
    %v685 = vsel %vm684, %v587, %v683
    %vm686 = vcmask 1044484
    %v687 = vsel %vm686, %v588, %v685
    %vm688 = vcmask 1045509
    %v689 = vsel %vm688, %v589, %v687
    %vm690 = vcmask 1046534
    %v691 = vsel %vm690, %v590, %v689
    %vm692 = vcmask 1047559
    %v693 = vsel %vm692, %v591, %v691
    %v695 = vsel %vm103, %v693, 0.0
    %696 = vadd.xlane.f32.xlu0 %v695
    %v697 = vpop.xlane.xlu0 %696
    %v698 = vmul.f32 %v697, 0.0625
    %v715 = vlaneseq
    %v716 = vand.u32 %v715, 127
    %v717 = vlaneseq
    %v718 = vshrl.u32 %v717, 7
    %v719 = vsub.s32 %v716, %v718
    %v720 = vrot.slane %v656, %v719
    %v721 = vadd.s32 %v716, 4294967288
    %v722 = vlaneseq
    %v723 = vshrl.u32 %v722, 7
    %v724 = vsub.s32 %v721, %v723
    %v725 = vrot.slane %v657, %v724
    %vm726 = vcmask 130112
    %v727 = vsel %vm726, %v725, %v720
    %v728 = vlaneseq
    %v729 = vshrl.u32 %v728, 7
    %v730 = vsub.s32 %v716, %v729
    %v731 = vrot.slane %v658, %v730
    %v732 = vlaneseq
    %v733 = vshrl.u32 %v732, 7
    %v734 = vsub.s32 %v721, %v733
    %v735 = vrot.slane %v659, %v734
    %v736 = vsel %vm726, %v735, %v731
    %v737 = vlaneseq
    %v738 = vshrl.u32 %v737, 7
    %v739 = vsub.s32 %v716, %v738
    %v740 = vrot.slane %v660, %v739
    %v741 = vlaneseq
    %v742 = vshrl.u32 %v741, 7
    %v743 = vsub.s32 %v721, %v742
    %v744 = vrot.slane %v661, %v743
    %v745 = vsel %vm726, %v744, %v740
    %v746 = vlaneseq
    %v747 = vshrl.u32 %v746, 7
    %v748 = vsub.s32 %v716, %v747
    %v749 = vrot.slane %v662, %v748
    %v750 = vlaneseq
    %v751 = vshrl.u32 %v750, 7
    %v752 = vsub.s32 %v721, %v751
    %v753 = vrot.slane %v663, %v752
    %v754 = vsel %vm726, %v753, %v749
    %v755 = vlaneseq
    %v756 = vshrl.u32 %v755, 7
    %v757 = vsub.s32 %v716, %v756
    %v758 = vrot.slane %v664, %v757
    %v759 = vlaneseq
    %v760 = vshrl.u32 %v759, 7
    %v761 = vsub.s32 %v721, %v760
    %v762 = vrot.slane %v665, %v761
    %v763 = vsel %vm726, %v762, %v758
    %v764 = vlaneseq
    %v765 = vshrl.u32 %v764, 7
    %v766 = vsub.s32 %v716, %v765
    %v767 = vrot.slane %v666, %v766
    %v768 = vlaneseq
    %v769 = vshrl.u32 %v768, 7
    %v770 = vsub.s32 %v721, %v769
    %v771 = vrot.slane %v667, %v770
    %v772 = vsel %vm726, %v771, %v767
    %v773 = vlaneseq
    %v774 = vshrl.u32 %v773, 7
    %v775 = vsub.s32 %v716, %v774
    %v776 = vrot.slane %v668, %v775
    %v777 = vlaneseq
    %v778 = vshrl.u32 %v777, 7
    %v779 = vsub.s32 %v721, %v778
    %v780 = vrot.slane %v669, %v779
    %v781 = vsel %vm726, %v780, %v776
    %v782 = vlaneseq
    %v783 = vshrl.u32 %v782, 7
    %v784 = vsub.s32 %v716, %v783
    %v785 = vrot.slane %v670, %v784
    %v786 = vlaneseq
    %v787 = vshrl.u32 %v786, 7
    %v788 = vsub.s32 %v721, %v787
    %v789 = vrot.slane %v671, %v788
    %v790 = vsel %vm726, %v789, %v785
    %v791 = vsel %vm680, %v736, %v727
    %v792 = vsel %vm682, %v745, %v791
    %v793 = vsel %vm684, %v754, %v792
    %v794 = vsel %vm686, %v763, %v793
    %v795 = vsel %vm688, %v772, %v794
    %v796 = vsel %vm690, %v781, %v795
    %v797 = vsel %vm692, %v790, %v796
    %v799 = vsel %vm103, %v797, 0.0
    %800 = vadd.xlane.f32.xlu0 %v799
    %v801 = vpop.xlane.xlu0 %800
    %v802 = vmul.f32 %v801, 0.0625
    %v803 = vadd.f32 %v698, %v802
    %vm804 = vcmask 7168
    %805 = vst.msk [vmem:[%s3] sm:$0xff] %vm804, %v803
    // Predicated region
    $region26: #{tpu_custom_call.1} parent=1 // pred_check
      _
    $region27: #{tpu_custom_call.1} parent=1 // pred_check_branch
      %807 = sbr.rel (0) target = $region29
    $region28: #{tpu_custom_call.1} parent=1 // pred_region
      _
    $region29: #{tpu_custom_call.1} parent=1 // pred_fallthru
      _
    // Predicated region
    $region30: #{tpu_custom_call.1} parent=1 // pred_check
      _
    $region31: #{tpu_custom_call.1} parent=1 // pred_check_branch
      %809 = sbr.rel (0) target = $region33
    $region32: #{tpu_custom_call.1} parent=1 // pred_region
      _
    $region33: #{tpu_custom_call.1} parent=1 // pred_fallthru
      _
    %810 = vsyncpa [#allocation3], 1
    %811 = vsyncpa [#allocation5], 1

</llo_original>
